<compile_context>
chip_gen: v5e
topology: v5e:2x2
jax: 0.10.0
libtpu: 0.0.40
codegen_flags: <defaults>
</compile_context>

<pallas_src>
import functools

import jax
import jax.numpy as jnp
import numpy as np
from jax.experimental import pallas as pl
from jax.experimental.pallas import tpu as pltpu

LANES = 128
QUANTILES = (0.1, 0.9, 0.1, 0.9)


def _amplitude_loss_kernel(p_ref, t_ref, o_ref, *,
                           a_vals, b_vals, valid_rows, inv_b, need_mask):
    # p_ref, t_ref : (tr, 128) f32 lane-dense tiles of the interleaved flat data
    # o_ref        : (8, 128)  f32 per-core partial-sum block (output = accumulator)
    c = pl.program_id(0)              # TensorCore split (parallel)
    i = pl.program_id(1)              # row-block index within this core (arbitrary)
    steps = pl.num_programs(1)

    @pl.when(i == 0)
    def _init():
        o_ref[...] = jnp.zeros_like(o_ref)

    err = t_ref[...] - p_ref[...]                         # (tr, 128), pure VPU

    # Per-lane folded patterns a = w*(q-1), b = w*q, built from a lane iota
    # (only ~a dozen single-vreg ops per step; avoids dense-constant operands).
    lane = jax.lax.broadcasted_iota(jnp.int32, (1, LANES), 1) % 4
    a = jnp.where(lane == 0, a_vals[0],
        jnp.where(lane == 1, a_vals[1],
        jnp.where(lane == 2, a_vals[2], a_vals[3]))).astype(jnp.float32)
    b = jnp.where(lane == 0, b_vals[0],
        jnp.where(lane == 1, b_vals[1],
        jnp.where(lane == 2, b_vals[2], b_vals[3]))).astype(jnp.float32)

    contrib = jnp.maximum(a * err, b * err)               # weighted pinball, (tr, 128)

    if need_mask:
        # Zero out rows that lie beyond the real data (partial final block and/or
        # the clamped duplicate block on the second parallel slice).
        tr = contrib.shape[0]
        row = jax.lax.broadcasted_iota(jnp.int32, (tr, 1), 0)
        global_row = row + (c * steps + i) * tr
        contrib = jnp.where(global_row < valid_rows, contrib, 0.0)

    # Reduce this block to one vreg (pure cross-vreg VPU adds, no XLU), and
    # accumulate into the resident output block.
    partial = jnp.sum(contrib.reshape(-1, 8, LANES), axis=0)   # (8, 128)
    o_ref[...] += partial

    @pl.when(i == steps - 1)
    def _finalize():
        o_ref[...] = o_ref[...] * inv_b


def amplitude_loss(preds, targets, weights=None, *, block_rows=4096):
    """
    preds:   tuple/list of 4 arrays, each [B, 1] (or [B]) float32
             (up_p10, up_p90, down_p10, down_p90)
    targets: [B, 4] float32 (columns in the same order)
    weights: optional list of 4 non-negative floats (default [1, 1, 1, 1])
    returns: scalar float32 loss
    """
    if weights is None:
        weights = [1.0, 1.0, 1.0, 1.0]
    weights = [float(w) for w in weights]
    a_vals = tuple(w * (q - 1.0) for q, w in zip(QUANTILES, weights))
    b_vals = tuple(w * q for q, w in zip(QUANTILES, weights))

    up_p10, up_p90, down_p10, down_p90 = preds
    B = up_p10.shape[0]
    n = 4 * B

    rows = -(-n // LANES)                 # ceil(n / 128)
    rows8 = -(-rows // 8) * 8             # round rows up to a sublane multiple
    n_padded = rows8 * LANES
    pad = n_padded - n

    # Interleaved preds slab (matches targets' native (B,4) order), flattened and
    # zero-padded in one fusable producer chain.  Targets flatten for free.
    preds_flat = jnp.concatenate(
        [jnp.reshape(x, (B, 1)) for x in (up_p10, up_p90, down_p10, down_p90)],
        axis=1,
    ).astype(jnp.float32).reshape(-1)
    targets_flat = jnp.reshape(targets.astype(jnp.float32), (-1,))
    if pad:
        preds_flat = jnp.pad(preds_flat, (0, pad))     # zeros contribute 0 pinball
        targets_flat = jnp.pad(targets_flat, (0, pad))
    p2 = preds_flat.reshape(rows8, LANES)
    t2 = targets_flat.reshape(rows8, LANES)

    # Row-block tiling; tr is always a multiple of 8.
    tr = min(block_rows, rows8)
    n_blocks = pl.cdiv(rows8, tr)
    steps_per_core = pl.cdiv(n_blocks, 2)               # 2-way split for v7x megacore
    need_mask = (2 * steps_per_core * tr != rows8)

    kernel = functools.partial(
        _amplitude_loss_kernel,
        a_vals=a_vals, b_vals=b_vals,
        valid_rows=rows8, inv_b=1.0 / B, need_mask=need_mask,
    )

    def idx(c, i):
        # Clamp so the DMA never walks past the array; masked rows zero any
        # duplicate contribution from the clamped block.
        return (jnp.minimum(c * steps_per_core + i, n_blocks - 1), 0)

    out = pl.pallas_call(
        kernel,
        out_shape=jax.ShapeDtypeStruct((16, LANES), jnp.float32),  # 2 x (8,128) partials
        grid=(2, steps_per_core),
        in_specs=[
            pl.BlockSpec((tr, LANES), idx),
            pl.BlockSpec((tr, LANES), idx),
        ],
        out_specs=pl.BlockSpec((8, LANES), lambda c, i: (c, 0)),
        compiler_params=pltpu.CompilerParams(
            dimension_semantics=("parallel", "arbitrary"),
        ),
        cost_estimate=pl.CostEstimate(
            flops=6 * n_padded,
            transcendentals=0,
            bytes_accessed=2 * n_padded * 4 + 16 * LANES * 4,
        ),
    )(p2, t2)

    # Tiny host-side reduction over the two per-core (8,128) partial blocks.
    return jnp.sum(out)


def _reference_loss(preds, targets, weights):
    # Pure-JAX reference mirroring the PyTorch module.
    loss = 0.0
    for i, (q, w) in enumerate(zip(QUANTILES, weights)):
        pred = jnp.reshape(preds[i], (-1, 1))
        tgt = targets[:, i:i + 1]
        err = tgt - pred
        loss += w * jnp.mean(jnp.maximum((q - 1.0) * err, q * err))
    return loss


def _make_inputs(key, B):
    k1, k2, k3, k4, k5 = jax.random.split(key, 5)
    preds = (
        jax.random.normal(k1, (B, 1), dtype=jnp.float32),
        jax.random.normal(k2, (B, 1), dtype=jnp.float32),
        jax.random.normal(k3, (B, 1), dtype=jnp.float32),
        jax.random.normal(k4, (B, 1), dtype=jnp.float32),
    )
    targets = jax.random.normal(k5, (B, 4), dtype=jnp.float32)
    return preds, targets


if __name__ == "__main__":
    key = jax.random.PRNGKey(0)

    # Small case matching the module's natural shapes (B=8, default weights).
    preds, targets = _make_inputs(key, 8)
    weights = [1.0, 1.0, 1.0, 1.0]
    loss = jax.block_until_ready(amplitude_loss(preds, targets, weights))
    ref = jax.block_until_ready(_reference_loss(preds, targets, weights))
    assert np.allclose(np.asarray(loss), np.asarray(ref), rtol=1e-5, atol=1e-6), (loss, ref)

    # Small case exercising padding / masking (B not a multiple of 32) and
    # non-trivial weights.
    preds2, targets2 = _make_inputs(jax.random.fold_in(key, 1), 37)
    weights2 = [0.5, 1.0, 2.0, 0.25]
    loss2 = jax.block_until_ready(amplitude_loss(preds2, targets2, weights2))
    ref2 = jax.block_until_ready(_reference_loss(preds2, targets2, weights2))
    assert np.allclose(np.asarray(loss2), np.asarray(ref2), rtol=1e-5, atol=1e-6), (loss2, ref2)

    print("KERNEL_OK")
</pallas_src>

<mosaic_0001>
module attributes {stable_mosaic.version = 11 : i64} {
  func.func @_amplitude_loss_kernel(%arg0: i32, %arg1: i32, %arg2: memref<8x128xf32, #tpu.memory_space<vmem>>, %arg3: memref<8x128xf32, #tpu.memory_space<vmem>>, %arg4: memref<8x128xf32, #tpu.memory_space<vmem>>) attributes {dimension_semantics = [#tpu.dimension_semantics<parallel>, #tpu.dimension_semantics<arbitrary>], iteration_bounds = array<i64: 2, 1>, scalar_prefetch = 0 : i64, scratch_operands = 0 : i64, tpu.core_type = #tpu.core_type<tc>, window_params = [{transform_indices = @transform_0, window_bounds = array<i64: 8, 128>}, {transform_indices = @transform_1, window_bounds = array<i64: 8, 128>}, {transform_indices = @transform_2, window_bounds = array<i64: 8, 128>}]} {
    %c0_i32 = arith.constant 0 : i32
    %0 = arith.cmpi eq, %arg1, %c0_i32 : i32
    %1 = arith.extui %0 : i1 to i32
    %c0_i32_0 = arith.constant 0 : i32
    %2 = arith.cmpi ne, %1, %c0_i32_0 : i32
    scf.if %2 {
      %cst_30 = arith.constant 0.000000e+00 : f32
      %74 = vector.broadcast %cst_30 : f32 to vector<8x128xf32>
      %c0_31 = arith.constant 0 : index
      %c0_32 = arith.constant 0 : index
      %75 = vector.load %arg4[%c0_31, %c0_32] : memref<8x128xf32, #tpu.memory_space<vmem>>, vector<8x128xf32>
      tpu.vector_store %arg4[%c0_31, %c0_32], %74 {strides = array<i32>} : memref<8x128xf32, #tpu.memory_space<vmem>>, vector<8x128xf32>,
    } else {
    }
    %c0 = arith.constant 0 : index
    %c0_1 = arith.constant 0 : index
    %3 = vector.load %arg3[%c0, %c0_1] : memref<8x128xf32, #tpu.memory_space<vmem>>, vector<8x128xf32>
    %c0_2 = arith.constant 0 : index
    %c0_3 = arith.constant 0 : index
    %4 = vector.load %arg2[%c0_2, %c0_3] : memref<8x128xf32, #tpu.memory_space<vmem>>, vector<8x128xf32>
    %5 = arith.subf %3, %4 : vector<8x128xf32>
    %6 = tpu.iota {dimensions = array<i32: 1>} : vector<1x128xi32>
    %c4_i32 = arith.constant 4 : i32
    %c0_i32_4 = arith.constant 0 : i32
    %7 = arith.cmpi eq, %c4_i32, %c0_i32_4 : i32
    %c1_i32 = arith.constant 1 : i32
    %8 = arith.select %7, %c1_i32, %c4_i32 : i32
    %9 = vector.broadcast %8 : i32 to vector<1x128xi32>
    %10 = arith.remsi %6, %9 : vector<1x128xi32>
    %c0_i32_5 = arith.constant 0 : i32
    %11 = vector.broadcast %c0_i32_5 : i32 to vector<1x128xi32>
    %12 = arith.cmpi ne, %10, %11 : vector<1x128xi32>
    %c0_i32_6 = arith.constant 0 : i32
    %13 = vector.broadcast %c0_i32_6 : i32 to vector<1x128xi32>
    %14 = arith.cmpi slt, %10, %13 : vector<1x128xi32>
    %c0_i32_7 = arith.constant 0 : i32
    %15 = arith.cmpi slt, %8, %c0_i32_7 : i32
    %16 = vector.broadcast %15 : i1 to vector<1x128xi1>
    %17 = vector.broadcast %16 : vector<1x128xi1> to vector<1x128xi1>
    %18 = arith.xori %14, %17 : vector<1x128xi1>
    %19 = arith.andi %18, %12 : vector<1x128xi1>
    %20 = vector.broadcast %8 : i32 to vector<1x128xi32>
    %21 = arith.addi %10, %20 : vector<1x128xi32>
    %22 = arith.select %19, %21, %10 : vector<1x128xi1>, vector<1x128xi32>
    %c0_i32_8 = arith.constant 0 : i32
    %23 = vector.broadcast %c0_i32_8 : i32 to vector<1x128xi32>
    %24 = arith.cmpi eq, %22, %23 : vector<1x128xi32>
    %c1_i32_9 = arith.constant 1 : i32
    %25 = vector.broadcast %c1_i32_9 : i32 to vector<1x128xi32>
    %26 = arith.cmpi eq, %22, %25 : vector<1x128xi32>
    %c2_i32 = arith.constant 2 : i32
    %27 = vector.broadcast %c2_i32 : i32 to vector<1x128xi32>
    %28 = arith.cmpi eq, %22, %27 : vector<1x128xi32>
    %cst = arith.constant -0.899999976 : f32
    %cst_10 = arith.constant -1.000000e-01 : f32
    %29 = vector.broadcast %cst : f32 to vector<1x128xf32>
    %30 = vector.broadcast %cst_10 : f32 to vector<1x128xf32>
    %31 = arith.select %28, %29, %30 : vector<1x128xi1>, vector<1x128xf32>
    %cst_11 = arith.constant -1.000000e-01 : f32
    %32 = vector.broadcast %cst_11 : f32 to vector<1x128xf32>
    %33 = arith.select %26, %32, %31 : vector<1x128xi1>, vector<1x128xf32>
    %cst_12 = arith.constant -0.899999976 : f32
    %34 = vector.broadcast %cst_12 : f32 to vector<1x128xf32>
    %35 = arith.select %24, %34, %33 : vector<1x128xi1>, vector<1x128xf32>
    %c0_i32_13 = arith.constant 0 : i32
    %36 = vector.broadcast %c0_i32_13 : i32 to vector<1x128xi32>
    %37 = arith.cmpi eq, %22, %36 : vector<1x128xi32>
    %c1_i32_14 = arith.constant 1 : i32
    %38 = vector.broadcast %c1_i32_14 : i32 to vector<1x128xi32>
    %39 = arith.cmpi eq, %22, %38 : vector<1x128xi32>
    %c2_i32_15 = arith.constant 2 : i32
    %40 = vector.broadcast %c2_i32_15 : i32 to vector<1x128xi32>
    %41 = arith.cmpi eq, %22, %40 : vector<1x128xi32>
    %cst_16 = arith.constant 1.000000e-01 : f32
    %cst_17 = arith.constant 0.899999976 : f32
    %42 = vector.broadcast %cst_16 : f32 to vector<1x128xf32>
    %43 = vector.broadcast %cst_17 : f32 to vector<1x128xf32>
    %44 = arith.select %41, %42, %43 : vector<1x128xi1>, vector<1x128xf32>
    %cst_18 = arith.constant 0.899999976 : f32
    %45 = vector.broadcast %cst_18 : f32 to vector<1x128xf32>
    %46 = arith.select %39, %45, %44 : vector<1x128xi1>, vector<1x128xf32>
    %cst_19 = arith.constant 1.000000e-01 : f32
    %47 = vector.broadcast %cst_19 : f32 to vector<1x128xf32>
    %48 = arith.select %37, %47, %46 : vector<1x128xi1>, vector<1x128xf32>
    %49 = vector.broadcast %35 : vector<1x128xf32> to vector<8x128xf32>
    %50 = arith.mulf %49, %5 : vector<8x128xf32>
    %51 = vector.broadcast %48 : vector<1x128xf32> to vector<8x128xf32>
    %52 = arith.mulf %51, %5 : vector<8x128xf32>
    %53 = arith.maximumf %50, %52 : vector<8x128xf32>
    %54 = tpu.iota {dimensions = array<i32: 0>} : vector<8x1xi32>
    %c1_i32_20 = arith.constant 1 : i32
    %55 = arith.muli %arg0, %c1_i32_20 : i32
    %56 = arith.addi %55, %arg1 : i32
    %c8_i32 = arith.constant 8 : i32
    %57 = arith.muli %56, %c8_i32 : i32
    %58 = vector.broadcast %57 : i32 to vector<8x1xi32>
    %59 = arith.addi %54, %58 : vector<8x1xi32>
    %c8_i32_21 = arith.constant 8 : i32
    %60 = vector.broadcast %c8_i32_21 : i32 to vector<8x1xi32>
    %61 = arith.cmpi slt, %59, %60 : vector<8x1xi32>
    %cst_22 = arith.constant 0.000000e+00 : f32
    %62 = vector.shape_cast %61 : vector<8x1xi1> to vector<8x1xi1>
    %63 = vector.broadcast %62 : vector<8x1xi1> to vector<8x128xi1>
    %64 = vector.broadcast %cst_22 : f32 to vector<8x128xf32>
    %65 = arith.select %63, %53, %64 : vector<8x128xi1>, vector<8x128xf32>
    %66 = vector.shape_cast %65 : vector<8x128xf32> to vector<1x8x128xf32>
    %cst_23 = arith.constant dense<0.000000e+00> : vector<8x128xf32>
    %67 = vector.multi_reduction <add>, %66, %cst_23 [0] : vector<1x8x128xf32> to vector<8x128xf32>
    %c0_24 = arith.constant 0 : index
    %c0_25 = arith.constant 0 : index
    %68 = vector.load %arg4[%c0_24, %c0_25] : memref<8x128xf32, #tpu.memory_space<vmem>>, vector<8x128xf32>
    %69 = arith.addf %68, %67 : vector<8x128xf32>
    %c0_26 = arith.constant 0 : index
    %c0_27 = arith.constant 0 : index
    %70 = vector.load %arg4[%c0_26, %c0_27] : memref<8x128xf32, #tpu.memory_space<vmem>>, vector<8x128xf32>
    tpu.vector_store %arg4[%c0_26, %c0_27], %69 {strides = array<i32>} : memref<8x128xf32, #tpu.memory_space<vmem>>, vector<8x128xf32>,
    %c0_i32_28 = arith.constant 0 : i32
    %71 = arith.cmpi eq, %arg1, %c0_i32_28 : i32
    %72 = arith.extui %71 : i1 to i32
    %c0_i32_29 = arith.constant 0 : i32
    %73 = arith.cmpi ne, %72, %c0_i32_29 : i32
    scf.if %73 {
      %c0_30 = arith.constant 0 : index
      %c0_31 = arith.constant 0 : index
      %74 = vector.load %arg4[%c0_30, %c0_31] : memref<8x128xf32, #tpu.memory_space<vmem>>, vector<8x128xf32>
      %cst_32 = arith.constant 1.250000e-01 : f32
      %75 = vector.broadcast %cst_32 : f32 to vector<8x128xf32>
      %76 = arith.mulf %74, %75 : vector<8x128xf32>
      %c0_33 = arith.constant 0 : index
      %c0_34 = arith.constant 0 : index
      %77 = vector.load %arg4[%c0_33, %c0_34] : memref<8x128xf32, #tpu.memory_space<vmem>>, vector<8x128xf32>
      tpu.vector_store %arg4[%c0_33, %c0_34], %76 {strides = array<i32>} : memref<8x128xf32, #tpu.memory_space<vmem>>, vector<8x128xf32>,
    } else {
    }
    return
  }
  func.func @transform_0(%arg0: i32, %arg1: i32) -> (i32, i32) {
    %c1_i32 = arith.constant 1 : i32
    %0 = arith.muli %arg0, %c1_i32 : i32
    %1 = arith.addi %0, %arg1 : i32
    %c0_i32 = arith.constant 0 : i32
    %2 = arith.minsi %1, %c0_i32 : i32
    %c0_i32_0 = arith.constant 0 : i32
    %c0_i32_1 = arith.constant 0 : i32
    return %2, %c0_i32_0 : i32, i32
  }
  func.func @transform_1(%arg0: i32, %arg1: i32) -> (i32, i32) {
    %c1_i32 = arith.constant 1 : i32
    %0 = arith.muli %arg0, %c1_i32 : i32
    %1 = arith.addi %0, %arg1 : i32
    %c0_i32 = arith.constant 0 : i32
    %2 = arith.minsi %1, %c0_i32 : i32
    %c0_i32_0 = arith.constant 0 : i32
    %c0_i32_1 = arith.constant 0 : i32
    return %2, %c0_i32_0 : i32, i32
  }
  func.func @transform_2(%arg0: i32, %arg1: i32) -> (i32, i32) {
    %c0_i32 = arith.constant 0 : i32
    %c0_i32_0 = arith.constant 0 : i32
    return %arg0, %c0_i32 : i32, i32
  }
}

</mosaic_0001>

<llo_original>
// kernel: tpu_custom_call.1
$region0: #{tpu_custom_call.1}
  #allocation0 [shape = 'u32[]', space=smem, size = 0x4, offset = 0x4, fixed_abs, tag = 'smem constant byte address 0x4 - core index']
  #allocation1 [shape = 'u32[72,128]{1,0:T(1,128)}', space=vmem, size = 0x9000, scoped, tag = 'internal scratch']
  %s0 = inlined_call_operand.hbm [shape: f32[8,128], index: 0, kind: input, shape index: {}]
  %s1 = inlined_call_operand.hbm [shape: f32[8,128], index: 1, kind: input, shape index: {}]
  %s2 = inlined_call_operand.hbm [shape: f32[16,128], index: 2, kind: output, shape index: {}]
  %s3 = sld [smem:[#allocation0]]
  $region57: #{tpu_custom_call.1} parent=0
    _
  %s5 = ssub.s32 1, %s3
  %s6 = scalar_select 0, %s5, %s3
  $region1: #{tpu_custom_call.1} parent=0
    #allocation2 [shape = 'u8[8192]{0}', space=vmem, size = 0x2000, scoped, tag = 'input window, operand 0']
    #allocation3 [shape = 's32[2]{0}', space=sflag, size = 0x8, scoped, tag = 'scoped memory for tpu_custom_call.1']
    #allocation4 [shape = 's32[2]{0}', space=sflag, size = 0x8, scoped, tag = 'scoped memory for tpu_custom_call.1']
    #allocation5 [shape = 'u8[8192]{0}', space=vmem, size = 0x2000, scoped, tag = 'input window, operand 1']
    #allocation6 [shape = 's32[2]{0}', space=sflag, size = 0x8, scoped, tag = 'scoped memory for tpu_custom_call.1']
    #allocation7 [shape = 'u8[8192]{0}', space=vmem, size = 0x2000, scoped, tag = 'output window, operand 0']
    %7 = vsyncpa [#allocation3], 0
    %s8 = scalar_lea.sflag [#allocation3], 1
    %9 = vsyncpa %s8, 0
    %10 = vsyncpa [#allocation6], 0
    %s11 = scalar_lea.sflag [#allocation6], 1
    %12 = vsyncpa %s11, 0
    %13 = vsyncpa [#allocation4], 0
    %s14 = scalar_lea.sflag [#allocation4], 1
    %15 = vsyncpa %s14, 0
    loop: start=0, step=1, limit=4
    $region2: #{tpu_custom_call.1} parent=1 // loop_pre_header
      _
    $region3: #{tpu_custom_call.1} parent=1 // loop_header
      %s17 = sphi 0, %s21
      %p18 = scmp.ge.s32.totalorder %s17, 4
      %s24 = sphi 0, %s36
      %s25 = sphi 0, %s32
      %s26 = sphi 0, %s24
      %s27 = sphi 0, %s25
      %s28 = sphi 0, %s26
      %s29 = sphi 0, %s27
      %s45 = sphi 0, %s47
      %s48 = sphi 0, %s45
      %s49 = sphi 0, %s48
      %s65 = sphi 0, %s49
      %s77 = sphi 0, %s79
      %s80 = sphi 0, %s77
      %s81 = sphi 0, %s80
      %s97 = sphi 0, %s81
      %s103 = sphi 0, %s105
      %s106 = sphi 0, %s103
      %s107 = sphi 0, %s106
      %s123 = sphi 0, %s107
    $region4: #{tpu_custom_call.1} parent=1 // loop_header_branch
      %20 = sbr.rel (%p18) target = $region8
    $region5: #{tpu_custom_call.1} parent=1 // loop_body
      %s22 = ssub.s32 %s17, 1
      %s23 = ssub.s32 %s17, 2
      %s30 = sadd.s32 1, %s25
      %p31 = scmp.ge.s32.totalorder %s30, 1
      %s32 = scalar_select %p31, 0, %s30
      %s33 = sadd.s32 1, %s24
      %s34 = scalar_select %p31, %s33, %s24
      %p35 = scmp.ge.s32.totalorder %s34, 2
      %s36 = scalar_select %p35, 0, %s34
      %s37 = sadd.s32 %s24, %s25
      %p38 = scmp.lt.s32.totalorder %s37, 0
      %s39 = scalar_select %p38, %s37, 0
      %s40 = sadd.s32 %s36, %s32
      %p41 = scmp.lt.s32.totalorder %s40, 0
      %s42 = scalar_select %p41, %s40, 0
      %s43 = ssub.s32 %s39, %s42
      %p44 = scmp.eq.s32.totalorder %s43, 0
      %s46 = sadd.s32 %s45, 1
      %s47 = scalar_select %p44, %s45, %s46
      %p50 = pneg %p44
      %p51 = scmp.eq.s32.totalorder %s17, 1
      %p52 = por %p50, %p51
      %p53 = scmp.ne.s32.totalorder %s45, %s48
      %p54 = scmp.eq.s32.totalorder %s17, 0
      %p55 = por %p53, %p54
      %p56 = scmp.ne.s32.totalorder %s45, %s48
      %p57 = scmp.eq.s32.totalorder %s22, 1
      %p58 = por %p56, %p57
      %p59 = scmp.ne.s32.totalorder %s48, %s49
      %p60 = scmp.eq.s32.totalorder %s22, 0
      %p61 = por %p59, %p60
      %p62 = scmp.ne.s32.totalorder %s48, %s49
      %p63 = scmp.eq.s32.totalorder %s23, 1
      %p64 = por %p62, %p63
      %p66 = scmp.ne.s32.totalorder %s49, %s65
      %p67 = scmp.eq.s32.totalorder %s23, 0
      %p68 = por %p66, %p67
      %s69 = sadd.s32 %s24, %s25
      %p70 = scmp.lt.s32.totalorder %s69, 0
      %s71 = scalar_select %p70, %s69, 0
      %s72 = sadd.s32 %s36, %s32
      %p73 = scmp.lt.s32.totalorder %s72, 0
      %s74 = scalar_select %p73, %s72, 0
      %s75 = ssub.s32 %s71, %s74
      %p76 = scmp.eq.s32.totalorder %s75, 0
      %s78 = sadd.s32 %s77, 1
      %s79 = scalar_select %p76, %s77, %s78
      %p82 = pneg %p76
      %p83 = scmp.eq.s32.totalorder %s17, 1
      %p84 = por %p82, %p83
      %p85 = scmp.ne.s32.totalorder %s77, %s80
      %p86 = scmp.eq.s32.totalorder %s17, 0
      %p87 = por %p85, %p86
      %p88 = scmp.ne.s32.totalorder %s77, %s80
      %p89 = scmp.eq.s32.totalorder %s22, 1
      %p90 = por %p88, %p89
      %p91 = scmp.ne.s32.totalorder %s80, %s81
      %p92 = scmp.eq.s32.totalorder %s22, 0
      %p93 = por %p91, %p92
      %p94 = scmp.ne.s32.totalorder %s80, %s81
      %p95 = scmp.eq.s32.totalorder %s23, 1
      %p96 = por %p94, %p95
      %p98 = scmp.ne.s32.totalorder %s81, %s97
      %p99 = scmp.eq.s32.totalorder %s23, 0
      %p100 = por %p98, %p99
      %s101 = ssub.s32 %s24, %s36
      %p102 = scmp.eq.s32.totalorder %s101, 0
      %s104 = sadd.s32 %s103, 1
      %s105 = scalar_select %p102, %s103, %s104
      %p108 = pneg %p102
      %p109 = scmp.eq.s32.totalorder %s17, 1
      %p110 = por %p108, %p109
      %p111 = scmp.ne.s32.totalorder %s103, %s106
      %p112 = scmp.eq.s32.totalorder %s17, 0
      %p113 = por %p111, %p112
      %p114 = scmp.ne.s32.totalorder %s103, %s106
      %p115 = scmp.eq.s32.totalorder %s22, 1
      %p116 = por %p114, %p115
      %p117 = scmp.ne.s32.totalorder %s106, %s107
      %p118 = scmp.eq.s32.totalorder %s22, 0
      %p119 = por %p117, %p118
      %p120 = scmp.ne.s32.totalorder %s106, %s107
      %p121 = scmp.eq.s32.totalorder %s23, 1
      %p122 = por %p120, %p121
      %p124 = scmp.ne.s32.totalorder %s107, %s123
      %p125 = scmp.eq.s32.totalorder %s23, 0
      %p126 = por %p124, %p125
      %p127 = scmp.le.s32.totalorder 1, %s17
      %p128 = scmp.lt.s32.totalorder %s17, 3
      %p129 = pnand %p127, %p128
      %p130 = pneg %p129
      // Predicated region
      $region9: #{tpu_custom_call.1} parent=5 // pred_check
        _
      $region10: #{tpu_custom_call.1} parent=5 // pred_check_branch
        %132 = sbr.rel (%p129) target = $region12
      $region11: #{tpu_custom_call.1} parent=5 // pred_region
        %s133 = ssub.s32 %s17, 1
      $region12: #{tpu_custom_call.1} parent=5 // pred_fallthru
        _
      %p134 = scmp.lt.s32.totalorder %s17, 2
      // Predicated region
      $region13: #{tpu_custom_call.1} parent=5 // pred_check
        %p135 = pneg %p134
      $region14: #{tpu_custom_call.1} parent=5 // pred_check_branch
        %137 = sbr.rel (%p135) target = $region16
      $region15: #{tpu_custom_call.1} parent=5 // pred_region
        // Predicated region
        $region17: #{tpu_custom_call.1} parent=15 // pred_check
          %p138 = pneg %p55
        $region18: #{tpu_custom_call.1} parent=15 // pred_check_branch
          %140 = sbr.rel (%p138) target = $region20
        $region19: #{tpu_custom_call.1} parent=15 // pred_region
          %s141 = sand.u32 %s45, 1
          %s142 = scalar_lea.sflag [#allocation3], %s141
          %s143 = sand.u32 %s45, 1
          %s144 = smul.addr %s143, 8
          %s145 = scalar_lea.vmem [#allocation2], %s144
          %s146 = sadd.s32 %s24, %s25
          %p147 = scmp.lt.s32.totalorder %s146, 0
          %s148 = scalar_select %p147, %s146, 0
          %150 = vsyncadd %s142, 0
          %s151 = smul.addr %s148, 8
          %s152 = scalar_lea.hbm %s0, %s151
          %s154 = sshll.u32 %s152, 4
          %s155 = int_to_ptr.hbm [resolvable:$true] %s154
          %s156 = sshll.u32 %s145, 4
          %s157 = int_to_ptr.vmem [resolvable:$true] %s156
          %159 = dma.hbm_to_vmem [thread:$0]  %s155, 128, %s157, %s142
        $region20: #{tpu_custom_call.1} parent=15 // pred_fallthru
          _
        // Predicated region
        $region21: #{tpu_custom_call.1} parent=15 // pred_check
          %p160 = pneg %p87
        $region22: #{tpu_custom_call.1} parent=15 // pred_check_branch
          %162 = sbr.rel (%p160) target = $region24
        $region23: #{tpu_custom_call.1} parent=15 // pred_region
          %s163 = sand.u32 %s77, 1
          %s164 = scalar_lea.sflag [#allocation6], %s163
          %s165 = sand.u32 %s77, 1
          %s166 = smul.addr %s165, 8
          %s167 = scalar_lea.vmem [#allocation5], %s166
          %s168 = sadd.s32 %s24, %s25
          %p169 = scmp.lt.s32.totalorder %s168, 0
          %s170 = scalar_select %p169, %s168, 0
          %172 = vsyncadd %s164, 0
          %s173 = smul.addr %s170, 8
          %s174 = scalar_lea.hbm %s1, %s173
          %s176 = sshll.u32 %s174, 4
          %s177 = int_to_ptr.hbm [resolvable:$true] %s176
          %s178 = sshll.u32 %s167, 4
          %s179 = int_to_ptr.vmem [resolvable:$true] %s178
          %181 = dma.hbm_to_vmem [thread:$0]  %s177, 128, %s179, %s164
        $region24: #{tpu_custom_call.1} parent=15 // pred_fallthru
          _
      $region16: #{tpu_custom_call.1} parent=5 // pred_fallthru
        _
      %p182 = scmp.le.s32.totalorder 1, %s17
      %p183 = scmp.lt.s32.totalorder %s17, 3
      %p184 = pnand %p182, %p183
      %p185 = pneg %p184
      // Predicated region
      $region25: #{tpu_custom_call.1} parent=5 // pred_check
        _
      $region26: #{tpu_custom_call.1} parent=5 // pred_check_branch
        %187 = sbr.rel (%p184) target = $region28
      $region27: #{tpu_custom_call.1} parent=5 // pred_region
        %s188 = ssub.s32 %s17, 1
        %s189 = sand.u32 %s48, 1
        %s190 = scalar_lea.sflag [#allocation3], %s189
        %s191 = sand.u32 %s48, 1
        %s192 = smul.addr %s191, 8
        %s193 = scalar_lea.vmem [#allocation2], %s192
        // Predicated region
        $region29: #{tpu_custom_call.1} parent=27 // pred_check
          %p194 = pneg %p61
        $region30: #{tpu_custom_call.1} parent=27 // pred_check_branch
          %196 = sbr.rel (%p194) target = $region32
        $region31: #{tpu_custom_call.1} parent=27 // pred_region
          %198 = dma.done %s190, 128
        $region32: #{tpu_custom_call.1} parent=27 // pred_fallthru
          _
        %s199 = sand.u32 %s80, 1
        %s200 = scalar_lea.sflag [#allocation6], %s199
        %s201 = sand.u32 %s80, 1
        %s202 = smul.addr %s201, 8
        %s203 = scalar_lea.vmem [#allocation5], %s202
        // Predicated region
        $region33: #{tpu_custom_call.1} parent=27 // pred_check
          %p204 = pneg %p93
        $region34: #{tpu_custom_call.1} parent=27 // pred_check_branch
          %206 = sbr.rel (%p204) target = $region36
        $region35: #{tpu_custom_call.1} parent=27 // pred_region
          %208 = dma.done %s200, 128
        $region36: #{tpu_custom_call.1} parent=27 // pred_fallthru
          _
        %s209 = sand.u32 %s48, 1
        %s210 = scalar_lea.sflag [#allocation3], %s209
        %s211 = sand.u32 %s48, 1
        %s212 = smul.addr %s211, 8
        %s213 = scalar_lea.vmem [#allocation2], %s212
        %p214 = pneg %p61
        %p215 = pneg %p58
        %s216 = sand.u32 %s80, 1
        %s217 = scalar_lea.sflag [#allocation6], %s216
        %s218 = sand.u32 %s80, 1
        %s219 = smul.addr %s218, 8
        %s220 = scalar_lea.vmem [#allocation5], %s219
        %p221 = pneg %p93
        %p222 = pneg %p90
        %p223 = pneg %p119
        %p224 = pneg %p116
        %s225 = sand.u32 %s106, 1
        %s226 = scalar_lea.sflag [#allocation4], %s225
        %s227 = sand.u32 %s106, 1
        %s228 = smul.addr %s227, 8
        %s229 = scalar_lea.vmem [#allocation7], %s228
        %s230 = sadd.s32 %s26, %s27
        %p231 = scmp.lt.s32.totalorder %s230, 0
        %s232 = scalar_select %p231, %s230, 0
        %s233 = sadd.s32 %s26, %s27
        %p234 = scmp.lt.s32.totalorder %s233, 0
        %s235 = scalar_select %p234, %s233, 0
        %p236 = scmp.eq.s32.totalorder %s27, 0
        // Predicated region
        $region37: #{tpu_custom_call.1} parent=27 // pred_check
          %p237 = pneg %p236
        $region38: #{tpu_custom_call.1} parent=27 // pred_check_branch
          %239 = sbr.rel (%p237) target = $region40
        $region39: #{tpu_custom_call.1} parent=27 // pred_region
          %240 = vst [vmem:[%s229] sm:$0xff] 0.0
        $region40: #{tpu_custom_call.1} parent=27 // pred_fallthru
          _
        %v241 = vld [vmem:[%s203] sm:$0xff]
        %v242 = vld [vmem:[%s193] sm:$0xff]
        %v243 = vsub.f32 %v241, %v242
        %v244 = vlaneseq
        %v245 = vand.u32 %v244, 127
        %vm246 = vcmp.lt.s32.totalorder %v245, 0
        %v247 = vsub.s32 0, %v245
        %v248 = vsel %vm246, %v247, %v245
        %v249 = vshrl.u32 %v248, 2
        %v250 = vand.u32 %v248, 3
        %v251 = vsub.s32 0, %v250
        %v252 = vsel %vm246, %v251, %v250
        %vm253 = vcmp.ne.s32.totalorder %v252, 0
        %vm254 = vcmp.lt.s32.totalorder %v252, 0
        %vm255 = vmand %vm254, %vm253
        %v256 = vadd.s32 %v252, 4
        %v257 = vsel %vm255, %v256, %v252
        %vm258 = vcmp.eq.s32.totalorder %v257, 0
        %vm259 = vcmp.eq.s32.totalorder %v257, 1
        %vm260 = vcmp.eq.s32.totalorder %v257, 2
        %v261 = vsel %vm260, -0.9, -0.1
        %v262 = vsel %vm259, -0.1, %v261
        %v263 = vsel %vm258, -0.9, %v262
        %v264 = vsel %vm260, 0.1, 0.9
        %v265 = vsel %vm259, 0.9, %v264
        %v266 = vsel %vm258, 0.1, %v265
        %v267 = vmul.f32 %v263, %v243
        %v268 = vmul.f32 %v266, %v243
        %v269 = vmax.f32 %v267, %v268
        %v270 = vlaneseq
        %v271 = vshrl.u32 %v270, 7
        %s272 = sadd.s32 %s26, %s27
        %s273 = smul.u32 %s272, 8
        %v274 = vstv %s273
        %v275 = vadd.s32 %v271, %v274
        %vm276 = vcmp.lt.s32.totalorder %v275, 8
        %v277 = vsel %vm276, 1, 0
        %vm278 = vcmp.eq.s32.totalorder %v277, 1
        %v279 = vsel %vm278, %v269, 0.0
        %v280 = vadd.f32 %v279, 0.0
        %v281 = vld [vmem:[%s229] sm:$0xff]
        %v282 = vadd.f32 %v281, %v280
        %283 = vst [vmem:[%s229] sm:$0xff] %v282
        // Predicated region
        $region41: #{tpu_custom_call.1} parent=27 // pred_check
          %p284 = pneg %p236
        $region42: #{tpu_custom_call.1} parent=27 // pred_check_branch
          %286 = sbr.rel (%p284) target = $region44
        $region43: #{tpu_custom_call.1} parent=27 // pred_region
          %v287 = vld [vmem:[%s229] sm:$0xff]
          %v288 = vmul.f32 %v287, 0.125
          %289 = vst [vmem:[%s229] sm:$0xff] %v288
        $region44: #{tpu_custom_call.1} parent=27 // pred_fallthru
          _
        %s290 = sand.u32 %s106, 1
        %s291 = scalar_lea.sflag [#allocation4], %s290
        %s292 = sand.u32 %s106, 1
        %s293 = smul.addr %s292, 8
        %s294 = scalar_lea.vmem [#allocation7], %s293
        // Predicated region
        $region45: #{tpu_custom_call.1} parent=27 // pred_check
          %p295 = pneg %p116
        $region46: #{tpu_custom_call.1} parent=27 // pred_check_branch
          %297 = sbr.rel (%p295) target = $region48
        $region47: #{tpu_custom_call.1} parent=27 // pred_region
          %299 = vsyncadd %s291, 0
          %s300 = smul.addr %s26, 8
          %s301 = scalar_lea.hbm %s2, %s300
          %s303 = sshll.u32 %s294, 4
          %s304 = int_to_ptr.vmem [resolvable:$true] %s303
          %s305 = sshll.u32 %s301, 4
          %s306 = int_to_ptr.hbm [resolvable:$true] %s305
          %308 = dma.vmem_to_hbm [thread:$0]  %s304, 128, %s306, %s291
        $region48: #{tpu_custom_call.1} parent=27 // pred_fallthru
          _
      $region28: #{tpu_custom_call.1} parent=5 // pred_fallthru
        _
      %p309 = scmp.le.s32.totalorder 2, %s17
      // Predicated region
      $region49: #{tpu_custom_call.1} parent=5 // pred_check
        %p310 = pneg %p309
      $region50: #{tpu_custom_call.1} parent=5 // pred_check_branch
        %312 = sbr.rel (%p310) target = $region52
      $region51: #{tpu_custom_call.1} parent=5 // pred_region
        %s313 = ssub.s32 %s17, 2
        // Predicated region
        $region53: #{tpu_custom_call.1} parent=51 // pred_check
          %p314 = pneg %p122
        $region54: #{tpu_custom_call.1} parent=51 // pred_check_branch
          %316 = sbr.rel (%p314) target = $region56
        $region55: #{tpu_custom_call.1} parent=51 // pred_region
          %s317 = sand.u32 %s107, 1
          %s318 = scalar_lea.sflag [#allocation4], %s317
          %s319 = sand.u32 %s107, 1
          %s320 = smul.addr %s319, 8
          %s321 = scalar_lea.vmem [#allocation7], %s320
          %323 = dma.done %s318, 128
        $region56: #{tpu_custom_call.1} parent=51 // pred_fallthru
          _
      $region52: #{tpu_custom_call.1} parent=5 // pred_fallthru
        _
    $region6: #{tpu_custom_call.1} parent=1 // loop_footer
      %s21 = sadd.s32 1, %s17
    $region7: #{tpu_custom_call.1} parent=1 // loop_footer_branch
      %16 = sbr.rel target = $region3
    $region8: #{tpu_custom_call.1} parent=1 // loop_exit
      _
    %324 = vsyncpa [#allocation3], 1
    %s325 = scalar_lea.sflag [#allocation3], 1
    %326 = vsyncpa %s325, 1
    %327 = vsyncpa [#allocation6], 1
    %s328 = scalar_lea.sflag [#allocation6], 1
    %329 = vsyncpa %s328, 1
    %330 = vsyncpa [#allocation4], 1
    %s331 = scalar_lea.sflag [#allocation4], 1
    %332 = vsyncpa %s331, 1

</llo_original>
